<compile_context>
chip_gen: v6e
topology: v6e:2x2x1
jax: 0.10.0
libtpu: 0.0.40
codegen_flags: <defaults>
</compile_context>

<pallas_src>
import functools

import jax
import jax.numpy as jnp
from jax.experimental import pallas as pl
from jax.experimental.pallas import tpu as pltpu


def _round_up(x, m):
    return ((x + m - 1) // m) * m


def _gcn_kernel(n_head, ahat_t_ref, x_ref, w_ref, b_ref, o_ref, xagg_ref):
    """One column tile of OUT^T = W @ AGG(X^T) + b.

    Only the leading `n_head` lanes of grid step 0 (the nodes referenced by
    edge_index, padded to a 128 multiple) need the normalized-adjacency
    aggregation; every other node of the flattened graph is a pure self-loop,
    i.e. the identity.
    """
    j = pl.program_id(0)

    @pl.when(j == 0)
    def _():
        # Aggregate first (contracts over F_in < F_out), then project.
        xagg_ref[...] = x_ref[...]
        xagg_ref[:, :n_head] = jnp.dot(
            x_ref[:, :n_head], ahat_t_ref[...],
            preferred_element_type=jnp.float32).astype(xagg_ref.dtype)
        o_ref[...] = (
            jnp.dot(w_ref[...], xagg_ref[...],
                    preferred_element_type=jnp.float32)
            + b_ref[...]).astype(o_ref.dtype)

    @pl.when(j != 0)
    def _():
        # Steady state: aggregation is the identity -> project + bias + store.
        o_ref[...] = (
            jnp.dot(w_ref[...], x_ref[...],
                    preferred_element_type=jnp.float32)
            + b_ref[...]).astype(o_ref.dtype)


def gcn_project_pallas(ahat_t, x_t, weight, bias, *, col_tile):
    """ahat_t: (n_head, n_head) Ahat^T head block.  x_t: (F_in, Ntot_pad).
    weight: (F_out, F_in).  bias: (F_out,).  Returns (F_out, Ntot_pad) f32."""
    f_in, ntot_pad = x_t.shape
    f_out = weight.shape[0]
    n_head = ahat_t.shape[0]
    assert col_tile % 128 == 0 and ntot_pad % col_tile == 0
    assert n_head <= col_tile  # all edge-connected nodes live in tile 0

    kernel = functools.partial(_gcn_kernel, n_head)
    return pl.pallas_call(
        kernel,
        out_shape=jax.ShapeDtypeStruct((f_out, ntot_pad), jnp.float32),
        grid_spec=pltpu.PrefetchScalarGridSpec(
            num_scalar_prefetch=0,
            grid=(ntot_pad // col_tile,),
            in_specs=[
                # Constant block index -> fetched once, stays VMEM-resident.
                pl.BlockSpec((n_head, n_head), lambda j: (0, 0)),
                pl.BlockSpec((f_in, col_tile), lambda j: (0, j)),
                pl.BlockSpec((f_out, f_in), lambda j: (0, 0)),
                pl.BlockSpec((f_out, 1), lambda j: (0, 0)),
            ],
            out_specs=pl.BlockSpec((f_out, col_tile), lambda j: (0, j)),
            scratch_shapes=[pltpu.VMEM((f_in, col_tile), x_t.dtype)],
        ),
        compiler_params=pltpu.CompilerParams(
            # Data-parallel column tiles: shards across the 2 TensorCores on
            # v7x, no-op on v5e/v6e.
            dimension_semantics=("parallel",),
            # Footprint is a few MiB even at col_tile=8192; explicit budget
            # keeps us inside every generation's scoped-VMEM limit.
            vmem_limit_bytes=32 * 1024 * 1024,
        ),
    )(ahat_t, x_t, weight, bias.reshape(f_out, 1))


def build_gcn_norm_adj(edge_index, num_nodes):
    """Dense D^{-1/2}(A+I)D^{-1/2} matching torch_geometric's gcn_norm
    (flow='source_to_target', add_remaining_self_loops, unit edge weights,
    duplicate edges counted)."""
    # TODO(synk): scatter-add adjacency build has no clean Pallas equivalent;
    # done in plain JAX (O(E) glue, not the hot path).  Non-unit edge weights
    # would need full add_remaining_self_loops semantics; the module never
    # passes edge weights.
    src = edge_index[0]
    dst = edge_index[1]
    w = jnp.where(src != dst, 1.0, 0.0).astype(jnp.float32)
    a = jnp.zeros((num_nodes, num_nodes), jnp.float32).at[dst, src].add(w)
    a = a + jnp.eye(num_nodes, dtype=jnp.float32)
    deg = a.sum(axis=1)
    dinv = jnp.where(deg > 0.0, jax.lax.rsqrt(deg), 0.0)
    return dinv[:, None] * a * dinv[None, :]


def precompute_norm_adj_head(edge_index, num_nodes, batch_size, time_steps):
    """(n_head, n_head) transposed normalized adjacency of the only block of
    the flattened graph that has edges.  Depends only on (edge_index, shapes),
    so it can be hoisted out of the per-call forward path and reused."""
    k = batch_size * time_steps
    # Exact replication of the module's edge_index.repeat(K, 1).view(2, -1).
    # All resulting indices still reference nodes [0, N): the full (Ntot, Ntot)
    # Ahat is blockdiag(Ahat_N, I) and is never materialized.
    ei_eff = jnp.tile(edge_index, (k, 1)).reshape(2, -1)
    ahat_n = build_gcn_norm_adj(ei_eff, num_nodes)
    n_head = _round_up(max(num_nodes, 1), 128)
    ahat_pad = jnp.eye(n_head, dtype=jnp.float32)
    ahat_pad = ahat_pad.at[:num_nodes, :num_nodes].set(ahat_n)
    return ahat_pad.T  # kernel aggregates columns: x_t @ Ahat^T


def spatial_conv_layer(x, edge_index, weight, bias, *, ahat_t=None,
                       col_tile=8192, compute_dtype=jnp.float32):
    """Mirrors SpatialConvLayer.forward (GCNConv over the flattened graph).

    x: (B, N, T, F_in), edge_index: (2, E) int, weight: (F_out, F_in),
    bias: (F_out,).  Returns (B, N, T, F_out) float32.
    """
    batch, num_nodes, time_steps, f_in = x.shape
    f_out = weight.shape[0]
    ntot = batch * time_steps * num_nodes

    if ahat_t is None:
        ahat_t = precompute_norm_adj_head(edge_index, num_nodes, batch,
                                          time_steps)
    n_head = ahat_t.shape[0]

    # Lane-dense slab: (F_in, B*T*N).  Single input transpose, replacing the
    # module's permute(0, 2, 1, 3) + reshape.
    x_t = jnp.transpose(x, (3, 0, 2, 1)).reshape(f_in, ntot)

    col_tile = _round_up(col_tile, 128)
    tn = max(n_head, min(col_tile, _round_up(ntot, 128)))
    ntot_pad = _round_up(ntot, tn)
    if ntot_pad != ntot:
        x_t = jnp.pad(x_t, ((0, 0), (0, ntot_pad - ntot)))

    # Optional bf16 MXU operands (accumulation stays f32) to halve HBM/VMEM
    # traffic on v6e/v7x; default f32 for bit-faithful parity with the module.
    x_t = x_t.astype(compute_dtype)
    w_c = weight.astype(compute_dtype)
    ahat_c = ahat_t.astype(compute_dtype)

    out_t = gcn_project_pallas(ahat_c, x_t, w_c, bias.astype(jnp.float32),
                               col_tile=tn)
    out_t = out_t[:, :ntot]
    # (F_out, B, T, N) -> (B, N, T, F_out): the module's final permute.
    return out_t.reshape(f_out, batch, time_steps,
                         num_nodes).transpose(1, 3, 2, 0)


if __name__ == "__main__":
    key = jax.random.PRNGKey(0)
    # B*T odd -> the effective (repeat+view) edge list is non-degenerate, so
    # the aggregation path is exercised; Ntot=240 also exercises lane padding.
    B, N, T, F_IN, F_OUT = 3, 16, 5, 16, 32
    kx, kw, kb = jax.random.split(key, 3)

    x = jax.random.normal(kx, (B, N, T, F_IN), dtype=jnp.float32)

    # Deterministic synthetic graph: bidirectional ring over the N nodes.
    i = jnp.arange(N)
    edge_index = jnp.stack([
        jnp.concatenate([i, (i + 1) % N]),
        jnp.concatenate([(i + 1) % N, i]),
    ]).astype(jnp.int32)                                  # (2, 2N)

    # GCNConv params: glorot-uniform weight (out, in), small random bias.
    limit = (6.0 / (F_IN + F_OUT)) ** 0.5
    weight = jax.random.uniform(kw, (F_OUT, F_IN), jnp.float32, -limit, limit)
    bias = 0.1 * jax.random.normal(kb, (F_OUT,), dtype=jnp.float32)

    # col_tile=128 so the toy problem still runs a multi-step pipelined grid.
    out = spatial_conv_layer(x, edge_index, weight, bias, col_tile=128)
    out = jax.block_until_ready(out)
    assert out.shape == (B, N, T, F_OUT)

    # Pure-JAX reference of the UNoptimized module math (dense (Ntot, Ntot)
    # Ahat) to validate the block-diagonal restructuring + Pallas hot path.
    x_flat = jnp.transpose(x, (0, 2, 1, 3)).reshape(-1, F_IN)
    ei_ref = jnp.tile(edge_index, (T * B, 1)).reshape(2, -1)
    ahat_full = build_gcn_norm_adj(ei_ref, x_flat.shape[0])
    ref = ahat_full @ (x_flat @ weight.T) + bias
    ref = ref.reshape(B, T, N, F_OUT).transpose(0, 2, 1, 3)
    assert jnp.allclose(out, ref, atol=1e-3, rtol=1e-3), "mismatch vs reference"

    print("KERNEL_OK")
</pallas_src>

<mosaic_0001>
module attributes {stable_mosaic.version = 11 : i64} {
  func.func @_gcn_kernel(%arg0: i32, %arg1: memref<128x128xf32, #tpu.memory_space<vmem>>, %arg2: memref<16x128xf32, #tpu.memory_space<vmem>>, %arg3: memref<32x16xf32, #tpu.memory_space<vmem>>, %arg4: memref<32x1xf32, #tpu.memory_space<vmem>>, %arg5: memref<32x128xf32, #tpu.memory_space<vmem>>, %arg6: memref<16x128xf32, #tpu.memory_space<vmem>>) attributes {dimension_semantics = [#tpu.dimension_semantics<parallel>], iteration_bounds = array<i64: 2>, scalar_prefetch = 0 : i64, scratch_operands = 1 : i64, tpu.core_type = #tpu.core_type<tc>, window_params = [{pipeline_mode = #tpu.pipeline_mode<synchronous>, transform_indices = @transform_0, window_bounds = array<i64: 128, 128>}, {transform_indices = @transform_1, window_bounds = array<i64: 16, 128>}, {pipeline_mode = #tpu.pipeline_mode<synchronous>, transform_indices = @transform_2, window_bounds = array<i64: 32, 16>}, {pipeline_mode = #tpu.pipeline_mode<synchronous>, transform_indices = @transform_3, window_bounds = array<i64: 32, 1>}, {transform_indices = @transform_4, window_bounds = array<i64: 32, 128>}]} {
    %c0_i32 = arith.constant 0 : i32
    %0 = arith.cmpi eq, %arg0, %c0_i32 : i32
    %1 = arith.extui %0 : i1 to i32
    %c0_i32_0 = arith.constant 0 : i32
    %2 = arith.cmpi ne, %1, %c0_i32_0 : i32
    scf.if %2 {
      %c0 = arith.constant 0 : index
      %c0_3 = arith.constant 0 : index
      %6 = vector.load %arg2[%c0, %c0_3] : memref<16x128xf32, #tpu.memory_space<vmem>>, vector<16x128xf32>
      %c0_4 = arith.constant 0 : index
      %c0_5 = arith.constant 0 : index
      %7 = vector.load %arg6[%c0_4, %c0_5] : memref<16x128xf32, #tpu.memory_space<vmem>>, vector<16x128xf32>
      tpu.vector_store %arg6[%c0_4, %c0_5], %6 {strides = array<i32>} : memref<16x128xf32, #tpu.memory_space<vmem>>, vector<16x128xf32>,
      %c0_6 = arith.constant 0 : index
      %c0_7 = arith.constant 0 : index
      %8 = vector.load %arg2[%c0_6, %c0_7] : memref<16x128xf32, #tpu.memory_space<vmem>>, vector<16x128xf32>
      %c0_8 = arith.constant 0 : index
      %c0_9 = arith.constant 0 : index
      %9 = vector.load %arg1[%c0_8, %c0_9] : memref<128x128xf32, #tpu.memory_space<vmem>>, vector<128x128xf32>
      %cst = arith.constant dense<0.000000e+00> : vector<16x128xf32>
      %10 = tpu.matmul %8, %9, %cst {dimension_numbers = #tpu.dot_dimension_numbers<[1], [0], [0], [1], [0, 0, 1, 1], [], []>} : vector<16x128xf32>, vector<128x128xf32>, vector<16x128xf32> -> vector<16x128xf32>
      %c0_10 = arith.constant 0 : index
      %c0_11 = arith.constant 0 : index
      %11 = vector.load %arg6[%c0_10, %c0_11] : memref<16x128xf32, #tpu.memory_space<vmem>>, vector<16x128xf32>
      tpu.vector_store %arg6[%c0_10, %c0_11], %10 {strides = array<i32>} : memref<16x128xf32, #tpu.memory_space<vmem>>, vector<16x128xf32>,
      %c0_12 = arith.constant 0 : index
      %c0_13 = arith.constant 0 : index
      %12 = vector.load %arg3[%c0_12, %c0_13] : memref<32x16xf32, #tpu.memory_space<vmem>>, vector<32x16xf32>
      %c0_14 = arith.constant 0 : index
      %c0_15 = arith.constant 0 : index
      %13 = vector.load %arg6[%c0_14, %c0_15] : memref<16x128xf32, #tpu.memory_space<vmem>>, vector<16x128xf32>
      %cst_16 = arith.constant dense<0.000000e+00> : vector<32x128xf32>
      %14 = tpu.matmul %12, %13, %cst_16 {dimension_numbers = #tpu.dot_dimension_numbers<[1], [0], [0], [1], [0, 0, 1, 1], [], []>} : vector<32x16xf32>, vector<16x128xf32>, vector<32x128xf32> -> vector<32x128xf32>
      %c0_17 = arith.constant 0 : index
      %c0_18 = arith.constant 0 : index
      %15 = vector.load %arg4[%c0_17, %c0_18] : memref<32x1xf32, #tpu.memory_space<vmem>>, vector<32x1xf32>
      %16 = vector.broadcast %15 : vector<32x1xf32> to vector<32x128xf32>
      %17 = arith.addf %14, %16 : vector<32x128xf32>
      %c0_19 = arith.constant 0 : index
      %c0_20 = arith.constant 0 : index
      %18 = vector.load %arg5[%c0_19, %c0_20] : memref<32x128xf32, #tpu.memory_space<vmem>>, vector<32x128xf32>
      tpu.vector_store %arg5[%c0_19, %c0_20], %17 {strides = array<i32>} : memref<32x128xf32, #tpu.memory_space<vmem>>, vector<32x128xf32>,
    } else {
    }
    %c0_i32_1 = arith.constant 0 : i32
    %3 = arith.cmpi ne, %arg0, %c0_i32_1 : i32
    %4 = arith.extui %3 : i1 to i32
    %c0_i32_2 = arith.constant 0 : i32
    %5 = arith.cmpi ne, %4, %c0_i32_2 : i32
    scf.if %5 {
      %c0 = arith.constant 0 : index
      %c0_3 = arith.constant 0 : index
      %6 = vector.load %arg3[%c0, %c0_3] : memref<32x16xf32, #tpu.memory_space<vmem>>, vector<32x16xf32>
      %c0_4 = arith.constant 0 : index
      %c0_5 = arith.constant 0 : index
      %7 = vector.load %arg2[%c0_4, %c0_5] : memref<16x128xf32, #tpu.memory_space<vmem>>, vector<16x128xf32>
      %cst = arith.constant dense<0.000000e+00> : vector<32x128xf32>
      %8 = tpu.matmul %6, %7, %cst {dimension_numbers = #tpu.dot_dimension_numbers<[1], [0], [0], [1], [0, 0, 1, 1], [], []>} : vector<32x16xf32>, vector<16x128xf32>, vector<32x128xf32> -> vector<32x128xf32>
      %c0_6 = arith.constant 0 : index
      %c0_7 = arith.constant 0 : index
      %9 = vector.load %arg4[%c0_6, %c0_7] : memref<32x1xf32, #tpu.memory_space<vmem>>, vector<32x1xf32>
      %10 = vector.broadcast %9 : vector<32x1xf32> to vector<32x128xf32>
      %11 = arith.addf %8, %10 : vector<32x128xf32>
      %c0_8 = arith.constant 0 : index
      %c0_9 = arith.constant 0 : index
      %12 = vector.load %arg5[%c0_8, %c0_9] : memref<32x128xf32, #tpu.memory_space<vmem>>, vector<32x128xf32>
      tpu.vector_store %arg5[%c0_8, %c0_9], %11 {strides = array<i32>} : memref<32x128xf32, #tpu.memory_space<vmem>>, vector<32x128xf32>,
    } else {
    }
    return
  }
  func.func @transform_0(%arg0: i32) -> (i32, i32) {
    %c0_i32 = arith.constant 0 : i32
    %c0_i32_0 = arith.constant 0 : i32
    %c0_i32_1 = arith.constant 0 : i32
    return %c0_i32, %c0_i32_0 : i32, i32
  }
  func.func @transform_1(%arg0: i32) -> (i32, i32) {
    %c0_i32 = arith.constant 0 : i32
    %c0_i32_0 = arith.constant 0 : i32
    return %c0_i32, %arg0 : i32, i32
  }
  func.func @transform_2(%arg0: i32) -> (i32, i32) {
    %c0_i32 = arith.constant 0 : i32
    %c0_i32_0 = arith.constant 0 : i32
    %c0_i32_1 = arith.constant 0 : i32
    return %c0_i32, %c0_i32_0 : i32, i32
  }
  func.func @transform_3(%arg0: i32) -> (i32, i32) {
    %c0_i32 = arith.constant 0 : i32
    %c0_i32_0 = arith.constant 0 : i32
    %c0_i32_1 = arith.constant 0 : i32
    return %c0_i32, %c0_i32_0 : i32, i32
  }
  func.func @transform_4(%arg0: i32) -> (i32, i32) {
    %c0_i32 = arith.constant 0 : i32
    %c0_i32_0 = arith.constant 0 : i32
    return %c0_i32, %arg0 : i32, i32
  }
}

</mosaic_0001>

<llo_original>
// kernel: tpu_custom_call.1
$region0: #{tpu_custom_call.1}
  #allocation0 [shape = 'u32[]', space=smem, size = 0x4, offset = 0x4, fixed_abs, tag = 'smem constant byte address 0x4 - core index']
  #allocation1 [shape = 'u32[144,128]{1,0:T(1,128)}', space=vmem, size = 0x12000, scoped, tag = 'internal scratch']
  #allocation2 [shape = 'f32[16,128]{1,0:T(8,128)}', space=vmem, size = 0x2000, scoped, tag = 'scratch operand']
  %s0 = inlined_call_operand.hbm [shape: f32[128,128], index: 0, kind: input, shape index: {}]
  %s1 = inlined_call_operand.vmem [shape: f32[16,256], index: 1, kind: input, shape index: {}]
  %s2 = inlined_call_operand.vmem [shape: f32[32,16], index: 2, kind: input, shape index: {}]
  %s3 = inlined_call_operand.vmem [shape: f32[32,1], index: 3, kind: input, shape index: {}]
  %s4 = inlined_call_operand.hbm [shape: f32[32,256], index: 4, kind: output, shape index: {}]
  %s5 = sld [smem:[#allocation0]]
  $region99: #{tpu_custom_call.1} parent=0
    _
  %s7 = ssub.s32 1, %s5
  %s8 = scalar_select 0, %s7, %s5
  $region1: #{tpu_custom_call.1} parent=0
    #allocation3 [shape = 'u8[65536]{0}', space=vmem, size = 0x10000, scoped, tag = 'input window, operand 0, single buffered']
    #allocation4 [shape = 's32[2]{0}', space=sflag, size = 0x8, scoped, tag = 'scoped memory for tpu_custom_call.1']
    #allocation5 [shape = 's32[2]{0}', space=sflag, size = 0x8, scoped, tag = 'scoped memory for tpu_custom_call.1']
    #allocation6 [shape = 'u8[16384]{0}', space=vmem, size = 0x4000, scoped, tag = 'input window, operand 1']
    #allocation7 [shape = 'u8[32768]{0}', space=vmem, size = 0x8000, scoped, tag = 'output window, operand 0']
    %9 = vsyncpa [#allocation4], 0
    %10 = vsyncpa [#allocation5], 0
    %s11 = scalar_lea.sflag [#allocation5], 1
    %12 = vsyncpa %s11, 0
    loop: start=0, step=1, limit=4
    $region2: #{tpu_custom_call.1} parent=1 // loop_pre_header
      _
    $region3: #{tpu_custom_call.1} parent=1 // loop_header
      %s14 = sphi 0, %s18
      %p15 = scmp.ge.s32.totalorder %s14, 4
      %s22 = sphi 0, %s22
      %s24 = sphi 0, %s22
      %s25 = sphi 0, %s24
      %s39 = sphi 0, %s25
      %s45 = sphi 0, %s47
      %s48 = sphi 0, %s45
      %s49 = sphi 0, %s48
      %s65 = sphi 0, %s49
      %s69 = sphi 0, %s69
      %s71 = sphi 0, %s69
      %s72 = sphi 0, %s71
      %s86 = sphi 0, %s72
      %s90 = sphi 0, %s90
      %s92 = sphi 0, %s90
      %s93 = sphi 0, %s92
      %s107 = sphi 0, %s93
      %s113 = sphi 0, %s115
      %s116 = sphi 0, %s113
      %s117 = sphi 0, %s116
      %s133 = sphi 0, %s117
    $region4: #{tpu_custom_call.1} parent=1 // loop_header_branch
      %17 = sbr.rel (%p15) target = $region8
    $region5: #{tpu_custom_call.1} parent=1 // loop_body
      %s19 = ssub.s32 %s14, 1
      %s20 = ssub.s32 %s14, 2
      %s21 = sadd.s32 %s14, 1
      %s23 = sadd.s32 %s22, 1
      %p26 = scmp.eq.s32.totalorder %s14, 1
      %p27 = scmp.ne.s32.totalorder %s22, %s24
      %p28 = scmp.eq.s32.totalorder %s14, 0
      %p29 = por %p27, %p28
      %p30 = scmp.ne.s32.totalorder %s22, %s24
      %p31 = scmp.eq.s32.totalorder %s19, 1
      %p32 = por %p30, %p31
      %p33 = scmp.ne.s32.totalorder %s24, %s25
      %p34 = scmp.eq.s32.totalorder %s19, 0
      %p35 = por %p33, %p34
      %p36 = scmp.ne.s32.totalorder %s24, %s25
      %p37 = scmp.eq.s32.totalorder %s20, 1
      %p38 = por %p36, %p37
      %p40 = scmp.ne.s32.totalorder %s25, %s39
      %p41 = scmp.eq.s32.totalorder %s20, 0
      %p42 = por %p40, %p41
      %s43 = ssub.s32 %s14, %s21
      %p44 = scmp.eq.s32.totalorder %s43, 0
      %s46 = sadd.s32 %s45, 1
      %s47 = scalar_select %p44, %s45, %s46
      %p50 = pneg %p44
      %p51 = scmp.eq.s32.totalorder %s14, 1
      %p52 = por %p50, %p51
      %p53 = scmp.ne.s32.totalorder %s45, %s48
      %p54 = scmp.eq.s32.totalorder %s14, 0
      %p55 = por %p53, %p54
      %p56 = scmp.ne.s32.totalorder %s45, %s48
      %p57 = scmp.eq.s32.totalorder %s19, 1
      %p58 = por %p56, %p57
      %p59 = scmp.ne.s32.totalorder %s48, %s49
      %p60 = scmp.eq.s32.totalorder %s19, 0
      %p61 = por %p59, %p60
      %p62 = scmp.ne.s32.totalorder %s48, %s49
      %p63 = scmp.eq.s32.totalorder %s20, 1
      %p64 = por %p62, %p63
      %p66 = scmp.ne.s32.totalorder %s49, %s65
      %p67 = scmp.eq.s32.totalorder %s20, 0
      %p68 = por %p66, %p67
      %s70 = sadd.s32 %s69, 1
      %p73 = scmp.eq.s32.totalorder %s14, 1
      %p74 = scmp.ne.s32.totalorder %s69, %s71
      %p75 = scmp.eq.s32.totalorder %s14, 0
      %p76 = por %p74, %p75
      %p77 = scmp.ne.s32.totalorder %s69, %s71
      %p78 = scmp.eq.s32.totalorder %s19, 1
      %p79 = por %p77, %p78
      %p80 = scmp.ne.s32.totalorder %s71, %s72
      %p81 = scmp.eq.s32.totalorder %s19, 0
      %p82 = por %p80, %p81
      %p83 = scmp.ne.s32.totalorder %s71, %s72
      %p84 = scmp.eq.s32.totalorder %s20, 1
      %p85 = por %p83, %p84
      %p87 = scmp.ne.s32.totalorder %s72, %s86
      %p88 = scmp.eq.s32.totalorder %s20, 0
      %p89 = por %p87, %p88
      %s91 = sadd.s32 %s90, 1
      %p94 = scmp.eq.s32.totalorder %s14, 1
      %p95 = scmp.ne.s32.totalorder %s90, %s92
      %p96 = scmp.eq.s32.totalorder %s14, 0
      %p97 = por %p95, %p96
      %p98 = scmp.ne.s32.totalorder %s90, %s92
      %p99 = scmp.eq.s32.totalorder %s19, 1
      %p100 = por %p98, %p99
      %p101 = scmp.ne.s32.totalorder %s92, %s93
      %p102 = scmp.eq.s32.totalorder %s19, 0
      %p103 = por %p101, %p102
      %p104 = scmp.ne.s32.totalorder %s92, %s93
      %p105 = scmp.eq.s32.totalorder %s20, 1
      %p106 = por %p104, %p105
      %p108 = scmp.ne.s32.totalorder %s93, %s107
      %p109 = scmp.eq.s32.totalorder %s20, 0
      %p110 = por %p108, %p109
      %s111 = ssub.s32 %s14, %s21
      %p112 = scmp.eq.s32.totalorder %s111, 0
      %s114 = sadd.s32 %s113, 1
      %s115 = scalar_select %p112, %s113, %s114
      %p118 = pneg %p112
      %p119 = scmp.eq.s32.totalorder %s14, 1
      %p120 = por %p118, %p119
      %p121 = scmp.ne.s32.totalorder %s113, %s116
      %p122 = scmp.eq.s32.totalorder %s14, 0
      %p123 = por %p121, %p122
      %p124 = scmp.ne.s32.totalorder %s113, %s116
      %p125 = scmp.eq.s32.totalorder %s19, 1
      %p126 = por %p124, %p125
      %p127 = scmp.ne.s32.totalorder %s116, %s117
      %p128 = scmp.eq.s32.totalorder %s19, 0
      %p129 = por %p127, %p128
      %p130 = scmp.ne.s32.totalorder %s116, %s117
      %p131 = scmp.eq.s32.totalorder %s20, 1
      %p132 = por %p130, %p131
      %p134 = scmp.ne.s32.totalorder %s117, %s133
      %p135 = scmp.eq.s32.totalorder %s20, 0
      %p136 = por %p134, %p135
      %p137 = scmp.le.s32.totalorder 1, %s14
      %p138 = scmp.lt.s32.totalorder %s14, 3
      %p139 = pnand %p137, %p138
      %p140 = pneg %p139
      // Predicated region
      $region9: #{tpu_custom_call.1} parent=5 // pred_check
        _
      $region10: #{tpu_custom_call.1} parent=5 // pred_check_branch
        %142 = sbr.rel (%p139) target = $region12
      $region11: #{tpu_custom_call.1} parent=5 // pred_region
        %s143 = ssub.s32 %s14, 1
        // Predicated region
        $region13: #{tpu_custom_call.1} parent=11 // pred_check
          %p144 = pneg %p35
        $region14: #{tpu_custom_call.1} parent=11 // pred_check_branch
          %146 = sbr.rel (%p144) target = $region16
        $region15: #{tpu_custom_call.1} parent=11 // pred_region
          %s148 = ssub.s32 2048, 2048
          %149 = vsyncadd [#allocation4], %s148
          %s150 = sshll.u32 [#allocation3], 4
          %s151 = int_to_ptr.vmem [resolvable:$true] %s150
          %156 = dma.hbm_to_vmem [thread:$0]  %s0, 2048, %s151, [#allocation4], 128, 128, 8
        $region16: #{tpu_custom_call.1} parent=11 // pred_fallthru
          _
        // Predicated region
        $region17: #{tpu_custom_call.1} parent=11 // pred_check
          %p157 = pneg %p82
        $region18: #{tpu_custom_call.1} parent=11 // pred_check_branch
          %159 = sbr.rel (%p157) target = $region20
        $region19: #{tpu_custom_call.1} parent=11 // pred_region
          _
        $region20: #{tpu_custom_call.1} parent=11 // pred_fallthru
          _
        // Predicated region
        $region21: #{tpu_custom_call.1} parent=11 // pred_check
          %p160 = pneg %p103
        $region22: #{tpu_custom_call.1} parent=11 // pred_check_branch
          %162 = sbr.rel (%p160) target = $region24
        $region23: #{tpu_custom_call.1} parent=11 // pred_region
          _
        $region24: #{tpu_custom_call.1} parent=11 // pred_fallthru
          _
      $region12: #{tpu_custom_call.1} parent=5 // pred_fallthru
        _
      %p163 = scmp.lt.s32.totalorder %s14, 2
      // Predicated region
      $region25: #{tpu_custom_call.1} parent=5 // pred_check
        %p164 = pneg %p163
      $region26: #{tpu_custom_call.1} parent=5 // pred_check_branch
        %166 = sbr.rel (%p164) target = $region28
      $region27: #{tpu_custom_call.1} parent=5 // pred_region
        // Predicated region
        $region29: #{tpu_custom_call.1} parent=27 // pred_check
          %p167 = pneg %p55
        $region30: #{tpu_custom_call.1} parent=27 // pred_check_branch
          %169 = sbr.rel (%p167) target = $region32
        $region31: #{tpu_custom_call.1} parent=27 // pred_region
          %s170 = sand.u32 %s45, 1
          %s171 = sand.u32 %s45, 1
          %s172 = smul.addr %s171, 16
          %s173 = scalar_lea.vmem [#allocation6], %s172
          %s174 = smul.addr %s14, 8
          %s175 = scalar_lea.vmem %s1, %s174
          // Predicated region
          $region33: #{tpu_custom_call.1} parent=31 // pred_check
            _
          $region34: #{tpu_custom_call.1} parent=31 // pred_check_branch
            %177 = sbr.rel (0) target = $region36
          $region35: #{tpu_custom_call.1} parent=31 // pred_region
            // Predicated region
            $region37: #{tpu_custom_call.1} parent=35 // pred_check
              _
            $region38: #{tpu_custom_call.1} parent=35 // pred_check_branch
              %179 = sbr.rel (0) target = $region40
            $region39: #{tpu_custom_call.1} parent=35 // pred_region
              // Predicated region
              $region52: #{tpu_custom_call.1} parent=39 // pred_check
                _
              $region53: #{tpu_custom_call.1} parent=39 // pred_check_branch
                %197 = sbr.rel (0) target = $region55
              $region54: #{tpu_custom_call.1} parent=39 // pred_region
                loop: start=0, step=1, limit=1
                $region56: #{tpu_custom_call.1} parent=54 // loop_pre_header
                  _
                $region57: #{tpu_custom_call.1} parent=54 // loop_header
                  %s199 = sphi 0, %s203
                  %p200 = scmp.ge.s32.totalorder %s199, 1
                  %s204 = sphi %s175, %s175
                  %s205 = sphi %s173, %s173
                $region58: #{tpu_custom_call.1} parent=54 // loop_header_branch
                  %202 = sbr.rel (%p200) target = $region62
                $region59: #{tpu_custom_call.1} parent=54 // loop_body
                  %v206 = vld [vmem:[%s204] sm:$0xff]
                  %207 = vst [vmem:[%s205] sm:$0xff] %v206
                  %v208 = vld [vmem:[%s204 + $0x10] sm:$0xff]
                  %209 = vst [vmem:[%s205 + $0x8] sm:$0xff] %v208
                $region60: #{tpu_custom_call.1} parent=54 // loop_footer
                  %s203 = sadd.s32 1, %s199
                $region61: #{tpu_custom_call.1} parent=54 // loop_footer_branch
                  %198 = sbr.rel target = $region57
                $region62: #{tpu_custom_call.1} parent=54 // loop_exit
                  _
              $region55: #{tpu_custom_call.1} parent=39 // pred_fallthru
                _
              // Predicated region
              $region63: #{tpu_custom_call.1} parent=39 // pred_check
                _
              $region64: #{tpu_custom_call.1} parent=39 // pred_check_branch
                %211 = sbr.rel target = $region66
              $region65: #{tpu_custom_call.1} parent=39 // pred_region
                _
              $region66: #{tpu_custom_call.1} parent=39 // pred_fallthru
                _
            $region40: #{tpu_custom_call.1} parent=35 // pred_fallthru
              _
            // Predicated region
            $region41: #{tpu_custom_call.1} parent=35 // pred_check
              _
            $region42: #{tpu_custom_call.1} parent=35 // pred_check_branch
              %181 = sbr.rel target = $region44
            $region43: #{tpu_custom_call.1} parent=35 // pred_region
              %s183 = ssub.s32 256, 1
              loop: start=0, step=1, limit=1
              $region45: #{tpu_custom_call.1} parent=43 // loop_pre_header
                _
              $region46: #{tpu_custom_call.1} parent=43 // loop_header
                %s185 = sphi 0, %s189
                %p186 = scmp.ge.s32.totalorder %s185, 1
                %s190 = sphi %s175, %s175
                %s191 = sphi %s173, %s173
              $region47: #{tpu_custom_call.1} parent=43 // loop_header_branch
                %188 = sbr.rel (%p186) target = $region51
              $region48: #{tpu_custom_call.1} parent=43 // loop_body
                %v192 = vld [vmem:[%s190] sm:%s183]
                %193 = vst [vmem:[%s191] sm:%s183] %v192
                %v194 = vld [vmem:[%s190 + $0x10] sm:%s183]
                %195 = vst [vmem:[%s191 + $0x8] sm:%s183] %v194
              $region49: #{tpu_custom_call.1} parent=43 // loop_footer
                %s189 = sadd.s32 1, %s185
              $region50: #{tpu_custom_call.1} parent=43 // loop_footer_branch
                %184 = sbr.rel target = $region46
              $region51: #{tpu_custom_call.1} parent=43 // loop_exit
                _
            $region44: #{tpu_custom_call.1} parent=35 // pred_fallthru
              _
          $region36: #{tpu_custom_call.1} parent=31 // pred_fallthru
            _
          %212 = vnop
        $region32: #{tpu_custom_call.1} parent=27 // pred_fallthru
          _
      $region28: #{tpu_custom_call.1} parent=5 // pred_fallthru
        _
      %p213 = scmp.le.s32.totalorder 1, %s14
      %p214 = scmp.lt.s32.totalorder %s14, 3
      %p215 = pnand %p213, %p214
      %p216 = pneg %p215
      // Predicated region
      $region67: #{tpu_custom_call.1} parent=5 // pred_check
        _
      $region68: #{tpu_custom_call.1} parent=5 // pred_check_branch
        %218 = sbr.rel (%p215) target = $region70
      $region69: #{tpu_custom_call.1} parent=5 // pred_region
        %s219 = ssub.s32 %s14, 1
        // Predicated region
        $region71: #{tpu_custom_call.1} parent=69 // pred_check
          %p220 = pneg %p35
        $region72: #{tpu_custom_call.1} parent=69 // pred_check_branch
          %222 = sbr.rel (%p220) target = $region74
        $region73: #{tpu_custom_call.1} parent=69 // pred_region
          %223 = dma.done [#allocation4], 2048
        $region74: #{tpu_custom_call.1} parent=69 // pred_fallthru
          _
        %s224 = sand.u32 %s48, 1
        %s225 = sand.u32 %s48, 1
        %s226 = smul.addr %s225, 16
        %s227 = scalar_lea.vmem [#allocation6], %s226
        // Predicated region
        $region75: #{tpu_custom_call.1} parent=69 // pred_check
          %p228 = pneg %p61
        $region76: #{tpu_custom_call.1} parent=69 // pred_check_branch
          %230 = sbr.rel (%p228) target = $region78
        $region77: #{tpu_custom_call.1} parent=69 // pred_region
          _
        $region78: #{tpu_custom_call.1} parent=69 // pred_fallthru
          _
        %p231 = pneg %p35
        %p232 = pneg %p32
        %s233 = sand.u32 %s48, 1
        %s234 = sand.u32 %s48, 1
        %s235 = smul.addr %s234, 16
        %s236 = scalar_lea.vmem [#allocation6], %s235
        %p237 = pneg %p61
        %p238 = pneg %p58
        %p239 = pneg %p82
        %p240 = pneg %p79
        %p241 = pneg %p103
        %p242 = pneg %p100
        %p243 = pneg %p129
        %p244 = pneg %p126
        %s245 = sand.u32 %s116, 1
        %s246 = scalar_lea.sflag [#allocation5], %s245
        %s247 = sand.u32 %s116, 1
        %s248 = smul.addr %s247, 32
        %s249 = scalar_lea.vmem [#allocation7], %s248
        %p250 = scmp.eq.s32.totalorder %s19, 0
        // Predicated region
        $region79: #{tpu_custom_call.1} parent=69 // pred_check
          %p251 = pneg %p250
        $region80: #{tpu_custom_call.1} parent=69 // pred_check_branch
          %253 = sbr.rel (%p251) target = $region82
        $region81: #{tpu_custom_call.1} parent=69 // pred_region
          %v254 = vld [vmem:[%s227] sm:$0xff]
          %v255 = vld [vmem:[%s227 + $0x8] sm:$0xff]
          %256 = vst [vmem:[#allocation2] sm:$0xff] %v254
          %257 = vst [vmem:[#allocation2 + $0x8] sm:$0xff] %v255
          %v258 = vld [vmem:[%s227] sm:$0xff]
          %v259 = vld [vmem:[%s227 + $0x8] sm:$0xff]
          %v260 = vld [vmem:[#allocation3] sm:$0xff]
          %v261 = vld [vmem:[#allocation3 + $0x8] sm:$0xff]
          %v262 = vld [vmem:[#allocation3 + $0x10] sm:$0xff]
          %v263 = vld [vmem:[#allocation3 + $0x18] sm:$0xff]
          %v264 = vld [vmem:[#allocation3 + $0x20] sm:$0xff]
          %v265 = vld [vmem:[#allocation3 + $0x28] sm:$0xff]
          %v266 = vld [vmem:[#allocation3 + $0x30] sm:$0xff]
          %v267 = vld [vmem:[#allocation3 + $0x38] sm:$0xff]
          %v268 = vld [vmem:[#allocation3 + $0x40] sm:$0xff]
          %v269 = vld [vmem:[#allocation3 + $0x48] sm:$0xff]
          %v270 = vld [vmem:[#allocation3 + $0x50] sm:$0xff]
          %v271 = vld [vmem:[#allocation3 + $0x58] sm:$0xff]
          %v272 = vld [vmem:[#allocation3 + $0x60] sm:$0xff]
          %v273 = vld [vmem:[#allocation3 + $0x68] sm:$0xff]
          %v274 = vld [vmem:[#allocation3 + $0x70] sm:$0xff]
          %v275 = vld [vmem:[#allocation3 + $0x78] sm:$0xff]
          %276 = vmatprep.subr.mxu0 0.0
          %277 = vmatpush1.msra.mxu0 %v275
          %278 = vmatprep.subr.mxu0 0.0
          %279 = vmatpush1.msra.mxu0 %v274
          %280 = vmatprep.subr.mxu0 0.0
          %281 = vmatpush1.msra.mxu0 %v273
          %282 = vmatprep.subr.mxu0 0.0
          %283 = vmatpush1.msra.mxu0 %v272
          %284 = vmatprep.subr.mxu0 0.0
          %285 = vmatpush1.msra.mxu0 %v271
          %286 = vmatprep.subr.mxu0 0.0
          %287 = vmatpush1.msra.mxu0 %v270
          %288 = vmatprep.subr.mxu0 0.0
          %289 = vmatpush1.msra.mxu0 %v269
          %290 = vmatprep.subr.mxu0 0.0
          %291 = vmatpush1.msra.mxu0 %v268
          %292 = vmatprep.subr.mxu0 0.0
          %293 = vmatpush1.msra.mxu0 %v267
          %294 = vmatprep.subr.mxu0 0.0
          %295 = vmatpush1.msra.mxu0 %v266
          %296 = vmatprep.subr.mxu0 0.0
          %297 = vmatpush1.msra.mxu0 %v265
          %298 = vmatprep.subr.mxu0 0.0
          %299 = vmatpush1.msra.mxu0 %v264
          %300 = vmatprep.subr.mxu0 0.0
          %301 = vmatpush1.msra.mxu0 %v263
          %302 = vmatprep.subr.mxu0 0.0
          %303 = vmatpush1.msra.mxu0 %v262
          %304 = vmatprep.subr.mxu0 0.0
          %305 = vmatpush1.msra.mxu0 %v261
          %306 = vmatprep.subr.mxu0 0.0
          %307 = vmatpush1.msra.mxu0 %v260
          %308 = vmatprep.subr.mxu0 0.0
          %309 = vmatpush2.msra.mxu0 0.0
          %310 = vmatprep.subr.mxu0 0.0
          %311 = vmatpush2.msra.mxu0 0.0
          %312 = vmatprep.subr.mxu0 0.0
          %313 = vmatpush2.msra.mxu0 0.0
          %314 = vmatprep.subr.mxu0 0.0
          %315 = vmatpush2.msra.mxu0 0.0
          %316 = vmatprep.subr.mxu0 0.0
          %317 = vmatpush2.msra.mxu0 0.0
          %318 = vmatprep.subr.mxu0 0.0
          %319 = vmatpush2.msra.mxu0 0.0
          %320 = vmatprep.subr.mxu0 0.0
          %321 = vmatpush2.msra.mxu0 0.0
          %322 = vmatprep.subr.mxu0 0.0
          %323 = vmatpush2.msra.mxu0 0.0
          %324 = vmatprep.subr.mxu0 0.0
          %325 = vmatpush2.msra.mxu0 0.0
          %326 = vmatprep.subr.mxu0 0.0
          %327 = vmatpush2.msra.mxu0 0.0
          %328 = vmatprep.subr.mxu0 0.0
          %329 = vmatpush2.msra.mxu0 0.0
          %330 = vmatprep.subr.mxu0 0.0
          %331 = vmatpush2.msra.mxu0 0.0
          %332 = vmatprep.subr.mxu0 0.0
          %333 = vmatpush2.msra.mxu0 0.0
          %334 = vmatprep.subr.mxu0 0.0
          %335 = vmatpush2.msra.mxu0 0.0
          %336 = vmatprep.subr.mxu0 0.0
          %337 = vmatpush2.msra.mxu0 0.0
          %338 = vmatprep.subr.mxu0 0.0
          %339 = vmatpush2.msra.mxu0 0.0
          %340 = vmatprep.mubr.f32.mxu0 0.0
          %341 = vmatmul.mubr.f32.gmra.mxu0 %v258
          %v342 = vpop.f32.mrf.mxu0
          %v343 = vadd.f32 0.0, %v342
          %v344 = vpop.f32.mrf.mxu0
          %345 = vmatprep.mubr.f32.mxu0 0.0
          %346 = vmatmul.mubr.f32.gmra.mxu0 %v259
          %v347 = vpop.f32.mrf.mxu0
          %v348 = vadd.f32 0.0, %v347
          %v349 = vpop.f32.mrf.mxu0
          %350 = vdwg.mxu0
          %351 = vst [vmem:[#allocation2] sm:$0xff] %v343
          %352 = vst [vmem:[#allocation2 + $0x8] sm:$0xff] %v348
          %v353 = vld [vmem:[%s2] sm:$0xff]
          %v354 = vld [vmem:[%s2 + $0x8] sm:$0xff]
          %v355 = vld [vmem:[%s2 + $0x10] sm:$0xff]
          %v356 = vld [vmem:[%s2 + $0x18] sm:$0xff]
          %v357 = vld [vmem:[#allocation2] sm:$0xff]
          %v358 = vld [vmem:[#allocation2 + $0x8] sm:$0xff]
          %v359 = vld [vmem:[%s3] sm:$0xff]
          %v360 = vld [vmem:[%s3 + $0x8] sm:$0xff]
          %v361 = vld [vmem:[%s3 + $0x10] sm:$0xff]
          %v362 = vld [vmem:[%s3 + $0x18] sm:$0xff]
          %364 = vset.pattern.permute.xlu0 0
          %365 = vperm.xlu0 %364, %v359
          %v366 = vpop.permute.xlu0 %365
          %369 = vset.pattern.permute.xlu0 0
          %370 = vperm.xlu0 %369, %v360
          %v371 = vpop.permute.xlu0 %370
          %374 = vset.pattern.permute.xlu0 0
          %375 = vperm.xlu0 %374, %v361
          %v376 = vpop.permute.xlu0 %375
          %379 = vset.pattern.permute.xlu0 0
          %380 = vperm.xlu0 %379, %v362
          %v381 = vpop.permute.xlu0 %380
          %vm383 = vcmask 130048
          %v385 = vsel %vm383, %v353, 0
          %v388 = vsel %vm383, %v354, 0
          %v391 = vsel %vm383, %v355, 0
          %v394 = vsel %vm383, %v356, 0
          %396 = vmatprep.subr.mxu0 0.0
          %397 = vmatpush1.msra.mxu0 0.0
          %398 = vmatprep.subr.mxu0 0.0
          %399 = vmatpush1.msra.mxu0 0.0
          %400 = vmatprep.subr.mxu0 0.0
          %401 = vmatpush1.msra.mxu0 0.0
          %402 = vmatprep.subr.mxu0 0.0
          %403 = vmatpush1.msra.mxu0 0.0
          %404 = vmatprep.subr.mxu0 0.0
          %405 = vmatpush1.msra.mxu0 0.0
          %406 = vmatprep.subr.mxu0 0.0
          %407 = vmatpush1.msra.mxu0 0.0
          %408 = vmatprep.subr.mxu0 0.0
          %409 = vmatpush1.msra.mxu0 0.0
          %410 = vmatprep.subr.mxu0 0.0
          %411 = vmatpush1.msra.mxu0 0.0
          %412 = vmatprep.subr.mxu0 0.0
          %413 = vmatpush1.msra.mxu0 0.0
          %414 = vmatprep.subr.mxu0 0.0
          %415 = vmatpush1.msra.mxu0 0.0
          %416 = vmatprep.subr.mxu0 0.0
          %417 = vmatpush1.msra.mxu0 0.0
          %418 = vmatprep.subr.mxu0 0.0
          %419 = vmatpush1.msra.mxu0 0.0
          %420 = vmatprep.subr.mxu0 0.0
          %421 = vmatpush1.msra.mxu0 0.0
          %422 = vmatprep.subr.mxu0 0.0
          %423 = vmatpush1.msra.mxu0 0.0
          %424 = vmatprep.subr.mxu0 0.0
          %425 = vmatpush1.msra.mxu0 %v358
          %426 = vmatprep.subr.mxu0 0.0
          %427 = vmatpush1.msra.mxu0 %v357
          %428 = vmatprep.subr.mxu0 0.0
          %429 = vmatpush2.msra.mxu0 0.0
          %430 = vmatprep.subr.mxu0 0.0
          %431 = vmatpush2.msra.mxu0 0.0
          %432 = vmatprep.subr.mxu0 0.0
          %433 = vmatpush2.msra.mxu0 0.0
          %434 = vmatprep.subr.mxu0 0.0
          %435 = vmatpush2.msra.mxu0 0.0
          %436 = vmatprep.subr.mxu0 0.0
          %437 = vmatpush2.msra.mxu0 0.0
          %438 = vmatprep.subr.mxu0 0.0
          %439 = vmatpush2.msra.mxu0 0.0
          %440 = vmatprep.subr.mxu0 0.0
          %441 = vmatpush2.msra.mxu0 0.0
          %442 = vmatprep.subr.mxu0 0.0
          %443 = vmatpush2.msra.mxu0 0.0
          %444 = vmatprep.subr.mxu0 0.0
          %445 = vmatpush2.msra.mxu0 0.0
          %446 = vmatprep.subr.mxu0 0.0
          %447 = vmatpush2.msra.mxu0 0.0
          %448 = vmatprep.subr.mxu0 0.0
          %449 = vmatpush2.msra.mxu0 0.0
          %450 = vmatprep.subr.mxu0 0.0
          %451 = vmatpush2.msra.mxu0 0.0
          %452 = vmatprep.subr.mxu0 0.0
          %453 = vmatpush2.msra.mxu0 0.0
          %454 = vmatprep.subr.mxu0 0.0
          %455 = vmatpush2.msra.mxu0 0.0
          %456 = vmatprep.subr.mxu0 0.0
          %457 = vmatpush2.msra.mxu0 0.0
          %458 = vmatprep.subr.mxu0 0.0
          %459 = vmatpush2.msra.mxu0 0.0
          %460 = vmatprep.mubr.f32.mxu0 0.0
          %461 = vmatmul.mubr.f32.gmra.mxu0 %v385
          %v462 = vpop.f32.mrf.mxu0
          %v463 = vadd.f32 %v366, %v462
          %v464 = vpop.f32.mrf.mxu0
          %465 = vmatprep.mubr.f32.mxu0 0.0
          %466 = vmatmul.mubr.f32.gmra.mxu0 %v388
          %v467 = vpop.f32.mrf.mxu0
          %v468 = vadd.f32 %v371, %v467
          %v469 = vpop.f32.mrf.mxu0
          %470 = vmatprep.mubr.f32.mxu0 0.0
          %471 = vmatmul.mubr.f32.gmra.mxu0 %v391
          %v472 = vpop.f32.mrf.mxu0
          %v473 = vadd.f32 %v376, %v472
          %v474 = vpop.f32.mrf.mxu0
          %475 = vmatprep.mubr.f32.mxu0 0.0
          %476 = vmatmul.mubr.f32.gmra.mxu0 %v394
          %v477 = vpop.f32.mrf.mxu0
          %v478 = vadd.f32 %v381, %v477
          %v479 = vpop.f32.mrf.mxu0
          %480 = vdwg.mxu0
          %481 = vst [vmem:[%s249] sm:$0xff] %v463
          %482 = vst [vmem:[%s249 + $0x8] sm:$0xff] %v468
          %483 = vst [vmem:[%s249 + $0x10] sm:$0xff] %v473
          %484 = vst [vmem:[%s249 + $0x18] sm:$0xff] %v478
        $region82: #{tpu_custom_call.1} parent=69 // pred_fallthru
          _
        %p485 = scmp.ne.s32.totalorder %s19, 0
        // Predicated region
        $region83: #{tpu_custom_call.1} parent=69 // pred_check
          %p486 = pneg %p485
        $region84: #{tpu_custom_call.1} parent=69 // pred_check_branch
          %488 = sbr.rel (%p486) target = $region86
        $region85: #{tpu_custom_call.1} parent=69 // pred_region
          %v489 = vld [vmem:[%s2] sm:$0xff]
          %v490 = vld [vmem:[%s2 + $0x8] sm:$0xff]
          %v491 = vld [vmem:[%s2 + $0x10] sm:$0xff]
          %v492 = vld [vmem:[%s2 + $0x18] sm:$0xff]
          %v493 = vld [vmem:[%s227] sm:$0xff]
          %v494 = vld [vmem:[%s227 + $0x8] sm:$0xff]
          %v495 = vld [vmem:[%s3] sm:$0xff]
          %v496 = vld [vmem:[%s3 + $0x8] sm:$0xff]
          %v497 = vld [vmem:[%s3 + $0x10] sm:$0xff]
          %v498 = vld [vmem:[%s3 + $0x18] sm:$0xff]
          %500 = vset.pattern.permute.xlu0 0
          %501 = vperm.xlu0 %500, %v495
          %v502 = vpop.permute.xlu0 %501
          %505 = vset.pattern.permute.xlu0 0
          %506 = vperm.xlu0 %505, %v496
          %v507 = vpop.permute.xlu0 %506
          %510 = vset.pattern.permute.xlu0 0
          %511 = vperm.xlu0 %510, %v497
          %v512 = vpop.permute.xlu0 %511
          %515 = vset.pattern.permute.xlu0 0
          %516 = vperm.xlu0 %515, %v498
          %v517 = vpop.permute.xlu0 %516
          %vm519 = vcmask 130048
          %v521 = vsel %vm519, %v489, 0
          %v524 = vsel %vm519, %v490, 0
          %v527 = vsel %vm519, %v491, 0
          %v530 = vsel %vm519, %v492, 0
          %532 = vmatprep.subr.mxu0 0.0
          %533 = vmatpush1.msra.mxu0 0.0
          %534 = vmatprep.subr.mxu0 0.0
          %535 = vmatpush1.msra.mxu0 0.0
          %536 = vmatprep.subr.mxu0 0.0
          %537 = vmatpush1.msra.mxu0 0.0
          %538 = vmatprep.subr.mxu0 0.0
          %539 = vmatpush1.msra.mxu0 0.0
          %540 = vmatprep.subr.mxu0 0.0
          %541 = vmatpush1.msra.mxu0 0.0
          %542 = vmatprep.subr.mxu0 0.0
          %543 = vmatpush1.msra.mxu0 0.0
          %544 = vmatprep.subr.mxu0 0.0
          %545 = vmatpush1.msra.mxu0 0.0
          %546 = vmatprep.subr.mxu0 0.0
          %547 = vmatpush1.msra.mxu0 0.0
          %548 = vmatprep.subr.mxu0 0.0
          %549 = vmatpush1.msra.mxu0 0.0
          %550 = vmatprep.subr.mxu0 0.0
          %551 = vmatpush1.msra.mxu0 0.0
          %552 = vmatprep.subr.mxu0 0.0
          %553 = vmatpush1.msra.mxu0 0.0
          %554 = vmatprep.subr.mxu0 0.0
          %555 = vmatpush1.msra.mxu0 0.0
          %556 = vmatprep.subr.mxu0 0.0
          %557 = vmatpush1.msra.mxu0 0.0
          %558 = vmatprep.subr.mxu0 0.0
          %559 = vmatpush1.msra.mxu0 0.0
          %560 = vmatprep.subr.mxu0 0.0
          %561 = vmatpush1.msra.mxu0 %v494
          %562 = vmatprep.subr.mxu0 0.0
          %563 = vmatpush1.msra.mxu0 %v493
          %564 = vmatprep.subr.mxu0 0.0
          %565 = vmatpush2.msra.mxu0 0.0
          %566 = vmatprep.subr.mxu0 0.0
          %567 = vmatpush2.msra.mxu0 0.0
          %568 = vmatprep.subr.mxu0 0.0
          %569 = vmatpush2.msra.mxu0 0.0
          %570 = vmatprep.subr.mxu0 0.0
          %571 = vmatpush2.msra.mxu0 0.0
          %572 = vmatprep.subr.mxu0 0.0
          %573 = vmatpush2.msra.mxu0 0.0
          %574 = vmatprep.subr.mxu0 0.0
          %575 = vmatpush2.msra.mxu0 0.0
          %576 = vmatprep.subr.mxu0 0.0
          %577 = vmatpush2.msra.mxu0 0.0
          %578 = vmatprep.subr.mxu0 0.0
          %579 = vmatpush2.msra.mxu0 0.0
          %580 = vmatprep.subr.mxu0 0.0
          %581 = vmatpush2.msra.mxu0 0.0
          %582 = vmatprep.subr.mxu0 0.0
          %583 = vmatpush2.msra.mxu0 0.0
          %584 = vmatprep.subr.mxu0 0.0
          %585 = vmatpush2.msra.mxu0 0.0
          %586 = vmatprep.subr.mxu0 0.0
          %587 = vmatpush2.msra.mxu0 0.0
          %588 = vmatprep.subr.mxu0 0.0
          %589 = vmatpush2.msra.mxu0 0.0
          %590 = vmatprep.subr.mxu0 0.0
          %591 = vmatpush2.msra.mxu0 0.0
          %592 = vmatprep.subr.mxu0 0.0
          %593 = vmatpush2.msra.mxu0 0.0
          %594 = vmatprep.subr.mxu0 0.0
          %595 = vmatpush2.msra.mxu0 0.0
          %596 = vmatprep.mubr.f32.mxu0 0.0
          %597 = vmatmul.mubr.f32.gmra.mxu0 %v521
          %v598 = vpop.f32.mrf.mxu0
          %v599 = vadd.f32 %v502, %v598
          %v600 = vpop.f32.mrf.mxu0
          %601 = vmatprep.mubr.f32.mxu0 0.0
          %602 = vmatmul.mubr.f32.gmra.mxu0 %v524
          %v603 = vpop.f32.mrf.mxu0
          %v604 = vadd.f32 %v507, %v603
          %v605 = vpop.f32.mrf.mxu0
          %606 = vmatprep.mubr.f32.mxu0 0.0
          %607 = vmatmul.mubr.f32.gmra.mxu0 %v527
          %v608 = vpop.f32.mrf.mxu0
          %v609 = vadd.f32 %v512, %v608
          %v610 = vpop.f32.mrf.mxu0
          %611 = vmatprep.mubr.f32.mxu0 0.0
          %612 = vmatmul.mubr.f32.gmra.mxu0 %v530
          %v613 = vpop.f32.mrf.mxu0
          %v614 = vadd.f32 %v517, %v613
          %v615 = vpop.f32.mrf.mxu0
          %616 = vdwg.mxu0
          %617 = vst [vmem:[%s249] sm:$0xff] %v599
          %618 = vst [vmem:[%s249 + $0x8] sm:$0xff] %v604
          %619 = vst [vmem:[%s249 + $0x10] sm:$0xff] %v609
          %620 = vst [vmem:[%s249 + $0x18] sm:$0xff] %v614
        $region86: #{tpu_custom_call.1} parent=69 // pred_fallthru
          _
        %s621 = sand.u32 %s116, 1
        %s622 = scalar_lea.sflag [#allocation5], %s621
        %s623 = sand.u32 %s116, 1
        %s624 = smul.addr %s623, 32
        %s625 = scalar_lea.vmem [#allocation7], %s624
        // Predicated region
        $region87: #{tpu_custom_call.1} parent=69 // pred_check
          %p626 = pneg %p126
        $region88: #{tpu_custom_call.1} parent=69 // pred_check_branch
          %628 = sbr.rel (%p626) target = $region90
        $region89: #{tpu_custom_call.1} parent=69 // pred_region
          %s630 = ssub.s32 512, 512
          %631 = vsyncadd %s622, %s630
          %s632 = smul.addr %s19, 128
          %s633 = scalar_lea.hbm %s4, %s632
          %s634 = sshll.u32 %s625, 4
          %s635 = int_to_ptr.vmem [resolvable:$true] %s634
          %640 = dma.vmem_to_hbm [thread:$0]  %s635, 512, %s633, %s622, 128, 256, 8
        $region90: #{tpu_custom_call.1} parent=69 // pred_fallthru
          _
      $region70: #{tpu_custom_call.1} parent=5 // pred_fallthru
        _
      %p641 = scmp.le.s32.totalorder 2, %s14
      // Predicated region
      $region91: #{tpu_custom_call.1} parent=5 // pred_check
        %p642 = pneg %p641
      $region92: #{tpu_custom_call.1} parent=5 // pred_check_branch
        %644 = sbr.rel (%p642) target = $region94
      $region93: #{tpu_custom_call.1} parent=5 // pred_region
        %s645 = ssub.s32 %s14, 2
        // Predicated region
        $region95: #{tpu_custom_call.1} parent=93 // pred_check
          %p646 = pneg %p132
        $region96: #{tpu_custom_call.1} parent=93 // pred_check_branch
          %648 = sbr.rel (%p646) target = $region98
        $region97: #{tpu_custom_call.1} parent=93 // pred_region
          %s649 = sand.u32 %s117, 1
          %s650 = scalar_lea.sflag [#allocation5], %s649
          %s651 = sand.u32 %s117, 1
          %s652 = smul.addr %s651, 32
          %s653 = scalar_lea.vmem [#allocation7], %s652
          %654 = dma.done %s650, 512
        $region98: #{tpu_custom_call.1} parent=93 // pred_fallthru
          _
      $region94: #{tpu_custom_call.1} parent=5 // pred_fallthru
        _
    $region6: #{tpu_custom_call.1} parent=1 // loop_footer
      %s18 = sadd.s32 1, %s14
    $region7: #{tpu_custom_call.1} parent=1 // loop_footer_branch
      %13 = sbr.rel target = $region3
    $region8: #{tpu_custom_call.1} parent=1 // loop_exit
      _
    %655 = vsyncpa [#allocation4], 1
    %s656 = scalar_lea.sflag [#allocation4], 1
    %657 = vsyncpa %s656, 1
    %658 = vsyncpa [#allocation5], 1
    %s659 = scalar_lea.sflag [#allocation5], 1
    %660 = vsyncpa %s659, 1

</llo_original>
